<compile_context>
chip_gen: v7x
topology: tpu7x:2x2x1
jax: 0.10.0
libtpu: 0.0.40
codegen_flags: <defaults>
</compile_context>

<pallas_src>
import functools

import jax
import jax.numpy as jnp
from jax import lax
from jax.experimental import pallas as pl
from jax.experimental.pallas import tpu as pltpu


def _round_up(n, m):
    return ((n + m - 1) // m) * m


def dqn_kernel(x_ref, w1_ref, b1_ref, w2_ref, b2_ref, w3_ref, b3_ref, o_ref,
               *, chunk):
    """One batch tile: (tb, 8) f32 -> (tb, 4) out_dtype, in row-chunks."""
    # Resident params (hoisted out of the chunk loop).
    w1 = w1_ref[...]                      # (8, 64)  bf16
    b1 = b1_ref[...]                      # (1, 64)  f32
    w2 = w2_ref[...]                      # (64, 32) bf16
    b2 = b2_ref[...]                      # (1, 32)  f32
    w3 = w3_ref[...]                      # (32, 4)  bf16
    b3 = b3_ref[...]                      # (1, 4)   f32

    n_chunks = x_ref.shape[0] // chunk    # wrapper guarantees exact division

    def body(c, carry):
        r = pl.multiple_of(c * chunk, chunk)
        # In-kernel bf16 cast of the streamed f32 rows (free on the VPU).
        x = x_ref[pl.ds(r, chunk), :].astype(jnp.bfloat16)          # (chunk, 8)

        # fc1 + ReLU (bf16 MXU matmul, f32 accumulate, f32 VPU epilogue)
        h1 = jnp.dot(x, w1, preferred_element_type=jnp.float32)
        h1 = jnp.maximum(h1 + b1, 0.0)                               # (chunk, 64)

        # fc2 + ReLU
        h2 = jnp.dot(h1.astype(jnp.bfloat16), w2,
                     preferred_element_type=jnp.float32)
        h2 = jnp.maximum(h2 + b2, 0.0)                               # (chunk, 32)

        # fc3 (no activation)
        h3 = jnp.dot(h2.astype(jnp.bfloat16), w3,
                     preferred_element_type=jnp.float32) + b3        # (chunk, 4)

        o_ref[pl.ds(r, chunk), :] = h3.astype(o_ref.dtype)
        return carry

    lax.fori_loop(0, n_chunks, body, 0)


def dqn_forward(x, params, tile_b=16384, chunk=1024, out_dtype=jnp.float32):
    """x: (B, 8) float32. params: dict of (in, out) weights and (1, out) biases."""
    B = x.shape[0]
    if B == 0:                                   # degenerate-batch guard
        return jnp.zeros((0, 4), out_dtype)

    chunk = max(8, _round_up(chunk, 8))

    # --- Tile selection -------------------------------------------------------
    # Big tiles amortize per-grid-step overhead; the inner chunk loop bounds the
    # live working set, so VMEM use stays ~2 MB even at tile_b=32768.
    tb = max(1, min(tile_b, B))
    if tb >= chunk:
        tb = _round_up(tb, chunk)                # exact inner-loop division
    else:
        tb = _round_up(tb, 8)
        chunk = tb                               # single chunk covers the tile
    # v7x: keep >= 2 grid steps for large batches so ("parallel",) can shard the
    # tiles across both TensorCores instead of idling one.
    if B > 2 * chunk and pl.cdiv(B, tb) < 2:
        tb = _round_up(pl.cdiv(B, 2), chunk)
    assert tb % chunk == 0

    grid = (pl.cdiv(B, tb),)                     # ragged last block is masked

    # bf16 weights (tiny, one-time cast); f32 biases for the f32 epilogue.
    w1 = params["w1"].astype(jnp.bfloat16)
    w2 = params["w2"].astype(jnp.bfloat16)
    w3 = params["w3"].astype(jnp.bfloat16)
    b1, b2, b3 = params["b1"], params["b2"], params["b3"]

    const = lambda arr: pl.BlockSpec(arr.shape, lambda i: (0,) * arr.ndim)

    out = pl.pallas_call(
        functools.partial(dqn_kernel, chunk=chunk),
        out_shape=jax.ShapeDtypeStruct((B, 4), out_dtype),
        grid=grid,
        in_specs=[
            pl.BlockSpec((tb, 8), lambda i: (i, 0)),   # x: streamed per tile (f32)
            const(w1), const(b1),                      # params: resident in VMEM
            const(w2), const(b2),
            const(w3), const(b3),
        ],
        out_specs=pl.BlockSpec((tb, 4), lambda i: (i, 0)),
        compiler_params=pltpu.CompilerParams(
            dimension_semantics=("parallel",),         # v7x: 2-TC sharding
        ),
    )(x, w1, b1, w2, b2, w3, b3)

    return out


def init_params(key):
    """Deterministic init matching the PyTorch layer shapes.

    PyTorch stores Linear weights as (out, in); we use the same
    uniform(-1/sqrt(in), 1/sqrt(in)) scheme and transpose to (in, out) for the
    kernel's plain `x @ W + b` layout.
    """
    def linear(key, fan_in, fan_out):
        kw, kb = jax.random.split(key)
        bound = 1.0 / jnp.sqrt(fan_in)
        w = jax.random.uniform(kw, (fan_out, fan_in), jnp.float32, -bound, bound)
        b = jax.random.uniform(kb, (fan_out,), jnp.float32, -bound, bound)
        return w.T, b.reshape(1, fan_out)

    k1, k2, k3 = jax.random.split(key, 3)
    w1, b1 = linear(k1, 8, 64)
    w2, b2 = linear(k2, 64, 32)
    w3, b3 = linear(k3, 32, 4)
    return {"w1": w1, "b1": b1, "w2": w2, "b2": b2, "w3": w3, "b3": b3}


def dqn_reference(x, p):
    """Pure-f32 reference matching the PyTorch module semantics."""
    h1 = jnp.maximum(x @ p["w1"] + p["b1"], 0.0)
    h2 = jnp.maximum(h1 @ p["w2"] + p["b2"], 0.0)
    return h2 @ p["w3"] + p["b3"]


if __name__ == "__main__":
    key = jax.random.PRNGKey(0)
    k_params, k_x1, k_x2, k_x3 = jax.random.split(key, 4)

    params = init_params(k_params)

    # Small single-tile test: batch=8, features=8.
    x_small = jax.random.normal(k_x1, (8, 8), jnp.float32)
    out_small = jax.block_until_ready(dqn_forward(x_small, params))
    ref_small = dqn_reference(x_small, params)
    assert out_small.shape == (8, 4)
    # bf16 weight/activation stream => compare vs f32 ref with bf16-level tol.
    assert jnp.allclose(out_small, ref_small, atol=3e-2, rtol=3e-2)

    # Multi grid-step + ragged last block (no wrapper-side padding copy).
    x_mid = jax.random.normal(k_x2, (100, 8), jnp.float32)
    out_mid = jax.block_until_ready(dqn_forward(x_mid, params, tile_b=32))
    ref_mid = dqn_reference(x_mid, params)
    assert out_mid.shape == (100, 4)
    assert jnp.allclose(out_mid, ref_mid, atol=3e-2, rtol=3e-2)

    # Exercise the inner chunk loop (one tile split into several row-chunks).
    x_chunk = jax.random.normal(k_x3, (96, 8), jnp.float32)
    out_chunk = jax.block_until_ready(
        dqn_forward(x_chunk, params, tile_b=96, chunk=16))
    ref_chunk = dqn_reference(x_chunk, params)
    assert out_chunk.shape == (96, 4)
    assert jnp.allclose(out_chunk, ref_chunk, atol=3e-2, rtol=3e-2)

    print("KERNEL_OK")
</pallas_src>

<mosaic_0001>
module attributes {stable_mosaic.version = 11 : i64} {
  func.func @dqn_kernel(%arg0: i32, %arg1: memref<8x8xf32, #tpu.memory_space<vmem>>, %arg2: memref<8x64xbf16, #tpu.memory_space<vmem>>, %arg3: memref<1x64xf32, #tpu.memory_space<vmem>>, %arg4: memref<64x32xbf16, #tpu.memory_space<vmem>>, %arg5: memref<1x32xf32, #tpu.memory_space<vmem>>, %arg6: memref<32x4xbf16, #tpu.memory_space<vmem>>, %arg7: memref<1x4xf32, #tpu.memory_space<vmem>>, %arg8: memref<8x4xf32, #tpu.memory_space<vmem>>) attributes {dimension_semantics = [#tpu.dimension_semantics<parallel>], iteration_bounds = array<i64: 1>, scalar_prefetch = 0 : i64, scratch_operands = 0 : i64, tpu.core_type = #tpu.core_type<tc>, window_params = [{transform_indices = @transform_0, window_bounds = array<i64: 8, 8>}, {pipeline_mode = #tpu.pipeline_mode<synchronous>, transform_indices = @transform_1, window_bounds = array<i64: 8, 64>}, {pipeline_mode = #tpu.pipeline_mode<synchronous>, transform_indices = @transform_2, window_bounds = array<i64: 1, 64>}, {pipeline_mode = #tpu.pipeline_mode<synchronous>, transform_indices = @transform_3, window_bounds = array<i64: 64, 32>}, {pipeline_mode = #tpu.pipeline_mode<synchronous>, transform_indices = @transform_4, window_bounds = array<i64: 1, 32>}, {pipeline_mode = #tpu.pipeline_mode<synchronous>, transform_indices = @transform_5, window_bounds = array<i64: 32, 4>}, {pipeline_mode = #tpu.pipeline_mode<synchronous>, transform_indices = @transform_6, window_bounds = array<i64: 1, 4>}, {transform_indices = @transform_7, window_bounds = array<i64: 8, 4>}]} {
    %c0 = arith.constant 0 : index
    %c0_0 = arith.constant 0 : index
    %0 = vector.load %arg2[%c0, %c0_0] : memref<8x64xbf16, #tpu.memory_space<vmem>>, vector<8x64xbf16>
    %c0_1 = arith.constant 0 : index
    %c0_2 = arith.constant 0 : index
    %1 = vector.load %arg3[%c0_1, %c0_2] : memref<1x64xf32, #tpu.memory_space<vmem>>, vector<1x64xf32>
    %c0_3 = arith.constant 0 : index
    %c0_4 = arith.constant 0 : index
    %2 = vector.load %arg4[%c0_3, %c0_4] : memref<64x32xbf16, #tpu.memory_space<vmem>>, vector<64x32xbf16>
    %c0_5 = arith.constant 0 : index
    %c0_6 = arith.constant 0 : index
    %3 = vector.load %arg5[%c0_5, %c0_6] : memref<1x32xf32, #tpu.memory_space<vmem>>, vector<1x32xf32>
    %c0_7 = arith.constant 0 : index
    %c0_8 = arith.constant 0 : index
    %4 = vector.load %arg6[%c0_7, %c0_8] : memref<32x4xbf16, #tpu.memory_space<vmem>>, vector<32x4xbf16>
    %c0_9 = arith.constant 0 : index
    %c0_10 = arith.constant 0 : index
    %5 = vector.load %arg7[%c0_9, %c0_10] : memref<1x4xf32, #tpu.memory_space<vmem>>, vector<1x4xf32>
    %c0_i32 = arith.constant 0 : i32
    %c8_i32 = arith.constant 8 : i32
    %6 = arith.muli %c0_i32, %c8_i32 : i32
    %7 = tpu.assume_multiple %6, 8 : i32
    %8 = arith.index_cast %7 : i32 to index
    %c0_11 = arith.constant 0 : index
    %9 = vector.load %arg1[%8, %c0_11] : memref<8x8xf32, #tpu.memory_space<vmem>>, vector<8x8xf32>
    %10 = arith.truncf %9 : vector<8x8xf32> to vector<8x8xbf16>
    %cst = arith.constant dense<0.000000e+00> : vector<8x64xf32>
    %11 = tpu.matmul %10, %0, %cst {dimension_numbers = #tpu.dot_dimension_numbers<[1], [0], [0], [1], [0, 0, 1, 1], [], []>} : vector<8x8xbf16>, vector<8x64xbf16>, vector<8x64xf32> -> vector<8x64xf32>
    %12 = vector.broadcast %1 : vector<1x64xf32> to vector<8x64xf32>
    %13 = arith.addf %11, %12 : vector<8x64xf32>
    %cst_12 = arith.constant 0.000000e+00 : f32
    %14 = vector.broadcast %cst_12 : f32 to vector<8x64xf32>
    %15 = arith.maximumf %13, %14 : vector<8x64xf32>
    %16 = arith.truncf %15 : vector<8x64xf32> to vector<8x64xbf16>
    %cst_13 = arith.constant dense<0.000000e+00> : vector<8x32xf32>
    %17 = tpu.matmul %16, %2, %cst_13 {dimension_numbers = #tpu.dot_dimension_numbers<[1], [0], [0], [1], [0, 0, 1, 1], [], []>} : vector<8x64xbf16>, vector<64x32xbf16>, vector<8x32xf32> -> vector<8x32xf32>
    %18 = vector.broadcast %3 : vector<1x32xf32> to vector<8x32xf32>
    %19 = arith.addf %17, %18 : vector<8x32xf32>
    %cst_14 = arith.constant 0.000000e+00 : f32
    %20 = vector.broadcast %cst_14 : f32 to vector<8x32xf32>
    %21 = arith.maximumf %19, %20 : vector<8x32xf32>
    %22 = arith.truncf %21 : vector<8x32xf32> to vector<8x32xbf16>
    %cst_15 = arith.constant dense<0.000000e+00> : vector<8x4xf32>
    %23 = tpu.matmul %22, %4, %cst_15 {dimension_numbers = #tpu.dot_dimension_numbers<[1], [0], [0], [1], [0, 0, 1, 1], [], []>} : vector<8x32xbf16>, vector<32x4xbf16>, vector<8x4xf32> -> vector<8x4xf32>
    %24 = vector.broadcast %5 : vector<1x4xf32> to vector<8x4xf32>
    %25 = arith.addf %23, %24 : vector<8x4xf32>
    %26 = arith.index_cast %7 : i32 to index
    %c0_16 = arith.constant 0 : index
    %27 = vector.load %arg8[%26, %c0_16] : memref<8x4xf32, #tpu.memory_space<vmem>>, vector<8x4xf32>
    tpu.vector_store %arg8[%26, %c0_16], %25 {strides = array<i32>} : memref<8x4xf32, #tpu.memory_space<vmem>>, vector<8x4xf32>,
    %c1_i32 = arith.constant 1 : i32
    return
  }
  func.func @transform_0(%arg0: i32) -> (i32, i32) {
    %c0_i32 = arith.constant 0 : i32
    %c0_i32_0 = arith.constant 0 : i32
    return %arg0, %c0_i32 : i32, i32
  }
  func.func @transform_1(%arg0: i32) -> (i32, i32) {
    %c0_i32 = arith.constant 0 : i32
    %c0_i32_0 = arith.constant 0 : i32
    %c0_i32_1 = arith.constant 0 : i32
    return %c0_i32, %c0_i32_0 : i32, i32
  }
  func.func @transform_2(%arg0: i32) -> (i32, i32) {
    %c0_i32 = arith.constant 0 : i32
    %c0_i32_0 = arith.constant 0 : i32
    %c0_i32_1 = arith.constant 0 : i32
    return %c0_i32, %c0_i32_0 : i32, i32
  }
  func.func @transform_3(%arg0: i32) -> (i32, i32) {
    %c0_i32 = arith.constant 0 : i32
    %c0_i32_0 = arith.constant 0 : i32
    %c0_i32_1 = arith.constant 0 : i32
    return %c0_i32, %c0_i32_0 : i32, i32
  }
  func.func @transform_4(%arg0: i32) -> (i32, i32) {
    %c0_i32 = arith.constant 0 : i32
    %c0_i32_0 = arith.constant 0 : i32
    %c0_i32_1 = arith.constant 0 : i32
    return %c0_i32, %c0_i32_0 : i32, i32
  }
  func.func @transform_5(%arg0: i32) -> (i32, i32) {
    %c0_i32 = arith.constant 0 : i32
    %c0_i32_0 = arith.constant 0 : i32
    %c0_i32_1 = arith.constant 0 : i32
    return %c0_i32, %c0_i32_0 : i32, i32
  }
  func.func @transform_6(%arg0: i32) -> (i32, i32) {
    %c0_i32 = arith.constant 0 : i32
    %c0_i32_0 = arith.constant 0 : i32
    %c0_i32_1 = arith.constant 0 : i32
    return %c0_i32, %c0_i32_0 : i32, i32
  }
  func.func @transform_7(%arg0: i32) -> (i32, i32) {
    %c0_i32 = arith.constant 0 : i32
    %c0_i32_0 = arith.constant 0 : i32
    return %arg0, %c0_i32 : i32, i32
  }
}

</mosaic_0001>

<llo_original>
// kernel: tpu_custom_call.1
$region0: #{tpu_custom_call.1}
  #allocation0 [shape = 'u32[]', space=smem, size = 0x4, offset = 0x4, fixed_abs, tag = 'smem constant byte address 0x4 - core index']
  #allocation1 [shape = 'u32[144,128]{1,0:T(1,128)}', space=vmem, size = 0x12000, scoped, tag = 'internal scratch']
  %s0 = inlined_call_operand.vmem [shape: f32[8,8], index: 0, kind: input, shape index: {}]
  %s1 = inlined_call_operand.vmem [shape: bf16[8,64], index: 1, kind: input, shape index: {}]
  %s2 = inlined_call_operand.vmem [shape: f32[1,64], index: 2, kind: input, shape index: {}]
  %s3 = inlined_call_operand.vmem [shape: bf16[64,32], index: 3, kind: input, shape index: {}]
  %s4 = inlined_call_operand.vmem [shape: f32[1,32], index: 4, kind: input, shape index: {}]
  %s5 = inlined_call_operand.vmem [shape: bf16[32,4], index: 5, kind: input, shape index: {}]
  %s6 = inlined_call_operand.vmem [shape: f32[1,4], index: 6, kind: input, shape index: {}]
  %s7 = inlined_call_operand.vmem [shape: f32[8,4], index: 7, kind: output, shape index: {}]
  %s8 = sld [smem:[#allocation0]]
  $region38: #{tpu_custom_call.1} parent=0
    _
  %s10 = ssub.s32 1, %s8
  %s11 = scalar_select 0, %s10, %s8
  // Predicated region
  $region2: #{tpu_custom_call.1} parent=0 // pred_check
    _
  $region3: #{tpu_custom_call.1} parent=0 // pred_check_branch
    %13 = sbr.rel (0) target = $region5
  $region4: #{tpu_custom_call.1} parent=0 // pred_region
    _
  $region5: #{tpu_custom_call.1} parent=0 // pred_fallthru
    _
  // Predicated region
  $region6: #{tpu_custom_call.1} parent=0 // pred_check
    _
  $region7: #{tpu_custom_call.1} parent=0 // pred_check_branch
    %15 = sbr.rel (0) target = $region9
  $region8: #{tpu_custom_call.1} parent=0 // pred_region
    _
  $region9: #{tpu_custom_call.1} parent=0 // pred_fallthru
    _
  // Predicated region
  $region10: #{tpu_custom_call.1} parent=0 // pred_check
    _
  $region11: #{tpu_custom_call.1} parent=0 // pred_check_branch
    %17 = sbr.rel (0) target = $region13
  $region12: #{tpu_custom_call.1} parent=0 // pred_region
    _
  $region13: #{tpu_custom_call.1} parent=0 // pred_fallthru
    _
  // Predicated region
  $region14: #{tpu_custom_call.1} parent=0 // pred_check
    _
  $region15: #{tpu_custom_call.1} parent=0 // pred_check_branch
    %19 = sbr.rel (0) target = $region17
  $region16: #{tpu_custom_call.1} parent=0 // pred_region
    _
  $region17: #{tpu_custom_call.1} parent=0 // pred_fallthru
    _
  // Predicated region
  $region18: #{tpu_custom_call.1} parent=0 // pred_check
    _
  $region19: #{tpu_custom_call.1} parent=0 // pred_check_branch
    %21 = sbr.rel (0) target = $region21
  $region20: #{tpu_custom_call.1} parent=0 // pred_region
    _
  $region21: #{tpu_custom_call.1} parent=0 // pred_fallthru
    _
  // Predicated region
  $region22: #{tpu_custom_call.1} parent=0 // pred_check
    _
  $region23: #{tpu_custom_call.1} parent=0 // pred_check_branch
    %23 = sbr.rel (0) target = $region25
  $region24: #{tpu_custom_call.1} parent=0 // pred_region
    _
  $region25: #{tpu_custom_call.1} parent=0 // pred_fallthru
    _
  // Predicated region
  $region26: #{tpu_custom_call.1} parent=0 // pred_check
    _
  $region27: #{tpu_custom_call.1} parent=0 // pred_check_branch
    %25 = sbr.rel (0) target = $region29
  $region28: #{tpu_custom_call.1} parent=0 // pred_region
    _
  $region29: #{tpu_custom_call.1} parent=0 // pred_fallthru
    _
  %v27 = vld [vmem:[%s1] sm:$0xf]
  %v28 = vld [vmem:[%s2] sm:$0x1]
  %v29 = vld [vmem:[%s3] sm:$0xf]
  %v30 = vld [vmem:[%s3 + $0x4] sm:$0xf]
  %v31 = vld [vmem:[%s3 + $0x8] sm:$0xf]
  %v32 = vld [vmem:[%s3 + $0xc] sm:$0xf]
  %v33 = vld [vmem:[%s3 + $0x10] sm:$0xf]
  %v34 = vld [vmem:[%s3 + $0x14] sm:$0xf]
  %v35 = vld [vmem:[%s3 + $0x18] sm:$0xf]
  %v36 = vld [vmem:[%s3 + $0x1c] sm:$0xf]
  %v37 = vld [vmem:[%s4] sm:$0x1]
  %v38 = vld [vmem:[%s5] sm:$0xf]
  %v39 = vld [vmem:[%s5 + $0x4] sm:$0xf]
  %v40 = vld [vmem:[%s5 + $0x8] sm:$0xf]
  %v41 = vld [vmem:[%s5 + $0xc] sm:$0xf]
  %v42 = vld [vmem:[%s6] sm:$0x1]
  %v43 = vld [vmem:[%s0] sm:$0xff]
  %v44 = vpack.c.bf16 %v43, %v43
  %v46 = vlaneseq
  %v47 = vshrl.u32 %v46, 7
  %v48 = vsub.s32 0, %v47
  %v49 = vrot.slane %v28, %v48
  %vm51 = vcmask 64512
  %v53 = vsel %vm51, %v44, 0
  %vm55 = vcmask 1043456
  %v57 = vsel %vm55, %v27, 0
  %59 = vmatprep.subr.bf16.mxu0 0
  %60 = vmatpush1.bf16.msra.mxu0 %v57
  %61 = vmatprep.subr.bf16.mxu0 0
  %62 = vmatpush1.bf16.msra.mxu0 0
  %63 = vmatprep.subr.bf16.mxu0 0
  %64 = vmatpush1.bf16.msra.mxu0 0
  %65 = vmatprep.subr.bf16.mxu0 0
  %66 = vmatpush1.bf16.msra.mxu0 0
  %67 = vmatprep.subr.bf16.mxu0 0
  %68 = vmatpush1.bf16.msra.mxu0 0
  %69 = vmatprep.subr.bf16.mxu0 0
  %70 = vmatpush1.bf16.msra.mxu0 0
  %71 = vmatprep.subr.bf16.mxu0 0
  %72 = vmatpush1.bf16.msra.mxu0 0
  %73 = vmatprep.subr.bf16.mxu0 0
  %74 = vmatpush1.bf16.msra.mxu0 0
  %75 = vmatprep.subr.bf16.mxu0 0
  %76 = vmatpush1.bf16.msra.mxu0 0
  %77 = vmatprep.subr.bf16.mxu0 0
  %78 = vmatpush1.bf16.msra.mxu0 0
  %79 = vmatprep.subr.bf16.mxu0 0
  %80 = vmatpush1.bf16.msra.mxu0 0
  %81 = vmatprep.subr.bf16.mxu0 0
  %82 = vmatpush1.bf16.msra.mxu0 0
  %83 = vmatprep.subr.bf16.mxu0 0
  %84 = vmatpush1.bf16.msra.mxu0 0
  %85 = vmatprep.subr.bf16.mxu0 0
  %86 = vmatpush1.bf16.msra.mxu0 0
  %87 = vmatprep.subr.bf16.mxu0 0
  %88 = vmatpush1.bf16.msra.mxu0 0
  %89 = vmatprep.subr.bf16.mxu0 0
  %90 = vmatpush1.bf16.msra.mxu0 0
  %91 = vmatprep.mubr.bf16.mxu0 0
  %92 = vmatmul.mubr.bf16.gmra.mrb[0].mxu0 %v53
  %v93 = vpop.f32.mrb[0].mxu0
  %v94 = vadd.f32 %v49, %v93
  %v95 = vpop.f32.mrb[0].mxu0
  %v96 = vpop.f32.mrb[0].mxu0
  %v97 = vpop.f32.mrb[0].mxu0
  %98 = vdwg.mxu0
  %v99 = vmax.f32 %v94, 0.0
  %v100 = vpack.c.bf16 %v99, %v99
  %v102 = vlaneseq
  %v103 = vshrl.u32 %v102, 7
  %v104 = vsub.s32 0, %v103
  %v105 = vrot.slane %v37, %v104
  %v115 = vunpack.c.l.b16 %v29
  %v116 = vunpack.c.l.b16 %v30
  %v117 = vunpack.c.l.b16 %v31
  %v118 = vunpack.c.l.b16 %v32
  %v119 = vunpack.c.l.b16 %v33
  %v120 = vunpack.c.l.b16 %v34
  %v121 = vunpack.c.l.b16 %v35
  %v122 = vunpack.c.l.b16 %v36
  %v123 = vpack.c.b16 %v116, %v115
  %v124 = vpack.c.b16 %v118, %v117
  %v125 = vpack.c.b16 %v120, %v119
  %v126 = vpack.c.b16 %v122, %v121
  %vm131 = vcmask 523264
  %v133 = vsel %vm131, %v100, 0
  %135 = vmatprep.subr.bf16.mxu0 0
  %136 = vmatpush1.bf16.msra.mxu0 %v123
  %137 = vmatprep.subr.bf16.mxu0 0
  %138 = vmatpush1.bf16.msra.mxu0 %v124
  %139 = vmatprep.subr.bf16.mxu0 0
  %140 = vmatpush1.bf16.msra.mxu0 %v125
  %141 = vmatprep.subr.bf16.mxu0 0
  %142 = vmatpush1.bf16.msra.mxu0 %v126
  %143 = vmatprep.subr.bf16.mxu0 0
  %144 = vmatpush1.bf16.msra.mxu0 0
  %145 = vmatprep.subr.bf16.mxu0 0
  %146 = vmatpush1.bf16.msra.mxu0 0
  %147 = vmatprep.subr.bf16.mxu0 0
  %148 = vmatpush1.bf16.msra.mxu0 0
  %149 = vmatprep.subr.bf16.mxu0 0
  %150 = vmatpush1.bf16.msra.mxu0 0
  %151 = vmatprep.subr.bf16.mxu0 0
  %152 = vmatpush1.bf16.msra.mxu0 0
  %153 = vmatprep.subr.bf16.mxu0 0
  %154 = vmatpush1.bf16.msra.mxu0 0
  %155 = vmatprep.subr.bf16.mxu0 0
  %156 = vmatpush1.bf16.msra.mxu0 0
  %157 = vmatprep.subr.bf16.mxu0 0
  %158 = vmatpush1.bf16.msra.mxu0 0
  %159 = vmatprep.subr.bf16.mxu0 0
  %160 = vmatpush1.bf16.msra.mxu0 0
  %161 = vmatprep.subr.bf16.mxu0 0
  %162 = vmatpush1.bf16.msra.mxu0 0
  %163 = vmatprep.subr.bf16.mxu0 0
  %164 = vmatpush1.bf16.msra.mxu0 0
  %165 = vmatprep.subr.bf16.mxu0 0
  %166 = vmatpush1.bf16.msra.mxu0 0
  %167 = vmatprep.mubr.bf16.mxu0 0
  %168 = vmatmul.mubr.bf16.gmra.mrb[0].mxu0 %v133
  %v169 = vpop.f32.mrb[0].mxu0
  %v170 = vadd.f32 %v105, %v169
  %v171 = vpop.f32.mrb[0].mxu0
  %v172 = vpop.f32.mrb[0].mxu0
  %v173 = vpop.f32.mrb[0].mxu0
  %174 = vdwg.mxu0
  %v175 = vmax.f32 %v170, 0.0
  %v176 = vpack.c.bf16 %v175, %v175
  %v178 = vlaneseq
  %v179 = vshrl.u32 %v178, 7
  %v180 = vsub.s32 0, %v179
  %v181 = vrot.slane %v42, %v180
  %v187 = vunpack.c.l.b16 %v38
  %v188 = vunpack.c.l.b16 %v39
  %v189 = vunpack.c.l.b16 %v40
  %v190 = vunpack.c.l.b16 %v41
  %v191 = vpack.c.b16 %v188, %v187
  %v192 = vpack.c.b16 %v190, %v189
  %vm195 = vcmask 261120
  %v197 = vsel %vm195, %v176, 0
  %199 = vmatprep.subr.bf16.mxu0 0
  %200 = vmatpush1.bf16.msra.mxu0 %v191
  %201 = vmatprep.subr.bf16.mxu0 0
  %202 = vmatpush1.bf16.msra.mxu0 %v192
  %203 = vmatprep.subr.bf16.mxu0 0
  %204 = vmatpush1.bf16.msra.mxu0 0
  %205 = vmatprep.subr.bf16.mxu0 0
  %206 = vmatpush1.bf16.msra.mxu0 0
  %207 = vmatprep.subr.bf16.mxu0 0
  %208 = vmatpush1.bf16.msra.mxu0 0
  %209 = vmatprep.subr.bf16.mxu0 0
  %210 = vmatpush1.bf16.msra.mxu0 0
  %211 = vmatprep.subr.bf16.mxu0 0
  %212 = vmatpush1.bf16.msra.mxu0 0
  %213 = vmatprep.subr.bf16.mxu0 0
  %214 = vmatpush1.bf16.msra.mxu0 0
  %215 = vmatprep.subr.bf16.mxu0 0
  %216 = vmatpush1.bf16.msra.mxu0 0
  %217 = vmatprep.subr.bf16.mxu0 0
  %218 = vmatpush1.bf16.msra.mxu0 0
  %219 = vmatprep.subr.bf16.mxu0 0
  %220 = vmatpush1.bf16.msra.mxu0 0
  %221 = vmatprep.subr.bf16.mxu0 0
  %222 = vmatpush1.bf16.msra.mxu0 0
  %223 = vmatprep.subr.bf16.mxu0 0
  %224 = vmatpush1.bf16.msra.mxu0 0
  %225 = vmatprep.subr.bf16.mxu0 0
  %226 = vmatpush1.bf16.msra.mxu0 0
  %227 = vmatprep.subr.bf16.mxu0 0
  %228 = vmatpush1.bf16.msra.mxu0 0
  %229 = vmatprep.subr.bf16.mxu0 0
  %230 = vmatpush1.bf16.msra.mxu0 0
  %231 = vmatprep.mubr.bf16.mxu0 0
  %232 = vmatmul.mubr.bf16.gmra.mrb[0].mxu0 %v197
  %v233 = vpop.f32.mrb[0].mxu0
  %v234 = vadd.f32 %v181, %v233
  %v235 = vpop.f32.mrb[0].mxu0
  %v236 = vpop.f32.mrb[0].mxu0
  %v237 = vpop.f32.mrb[0].mxu0
  %238 = vdwg.mxu0
  %vm239 = vcmask 31744
  %240 = vst.msk [vmem:[%s7] sm:$0xff] %vm239, %v234
  // Predicated region
  $region30: #{tpu_custom_call.1} parent=0 // pred_check
    _
  $region31: #{tpu_custom_call.1} parent=0 // pred_check_branch
    %242 = sbr.rel (0) target = $region33
  $region32: #{tpu_custom_call.1} parent=0 // pred_region
    _
  $region33: #{tpu_custom_call.1} parent=0 // pred_fallthru
    _
  // Predicated region
  $region34: #{tpu_custom_call.1} parent=0 // pred_check
    _
  $region35: #{tpu_custom_call.1} parent=0 // pred_check_branch
    %244 = sbr.rel (0) target = $region37
  $region36: #{tpu_custom_call.1} parent=0 // pred_region
    _
  $region37: #{tpu_custom_call.1} parent=0 // pred_fallthru
    _

</llo_original>
